<compile_context>
chip_gen: v7x
topology: tpu7x:2x2x1
jax: 0.10.0
libtpu: 0.0.40
codegen_flags: <defaults>
</compile_context>

<pallas_src>
import functools

import jax
import jax.numpy as jnp
import numpy as np
from jax.experimental import pallas as pl
from jax.experimental.pallas import tpu as pltpu


def _se_attention_kernel(x_ref, w1t_ref, w2_ref, se_ref, sim_ref, *, inv_hw):
    # x_ref block: (TB, C, HW) in the input's native dtype; compute in f32.
    x = x_ref[...].astype(jnp.float32)                           # (TB, C, HW)

    # --- squeeze: global average pool over the spatial (lane) axis -------------
    pooled = jnp.sum(x, axis=2, keepdims=True) * inv_hw          # (TB, C, 1)

    # --- excitation: Linear -> ReLU -> Linear -> Sigmoid (bias-free) -----------
    # Tiny (TB, C, R) intermediates; broadcast-multiply + reduce on the VPU keeps
    # every operand in its native layout (no relayout / MXU drain for N=1 matvecs).
    # TODO(synk): for C >= 256 switch to a batched MXU dot ((TB,C)@(C,R) -> relu -> (R,C)).
    h = jnp.sum(w1t_ref[...][None, :, :] * pooled,
                axis=1, keepdims=True)                           # (TB, 1, R)
    h = jnp.maximum(h, 0.0)
    y = jnp.sum(w2_ref[...][None, :, :] * h,
                axis=2, keepdims=True)                           # (TB, C, 1)
    y = jax.nn.sigmoid(y)

    # --- scale: lane-dense (TB, C, HW) store in the output dtype ---------------
    se = x * y
    se_ref[...] = se.astype(se_ref.dtype)

    # --- per-pixel cosine similarity along C (rsqrt on the EUP) ----------------
    # Reuse x2 = x*x for all three channel reductions instead of materializing
    # three independent block-sized products (se*x, se*se, x*x):
    #   num  = sum_C(se * x)  = sum_C(x2 * y)
    #   nse2 = sum_C(se * se) = sum_C(x2 * y^2)
    #   nx2  = sum_C(x * x)   = sum_C(x2)
    x2 = x * x
    y2 = y * y                                                   # (TB, C, 1) tiny
    nx2 = jnp.sum(x2, axis=1, keepdims=True)                     # (TB, 1, HW)
    num = jnp.sum(x2 * y, axis=1, keepdims=True)                 # (TB, 1, HW)
    nse2 = jnp.sum(x2 * y2, axis=1, keepdims=True)               # (TB, 1, HW)
    eps2 = jnp.float32(1e-16)                                    # (eps = 1e-8) ** 2
    cos = (num
           * jax.lax.rsqrt(jnp.maximum(nse2, eps2))
           * jax.lax.rsqrt(jnp.maximum(nx2, eps2)))              # (TB, 1, HW)

    # Per-example sum; the logical HW extent means Mosaic masks any lane padding.
    sim_ref[...] = jnp.sum(cos, axis=2, keepdims=True)           # (TB, 1, 1)


def se_attention(x_nchw, w1, w2, *, out_dtype=None):
    """SEAttention forward.

    x_nchw: (B, C, H, W);  w1: (C//r, C) = fc[0].weight;  w2: (C, C//r) = fc[2].weight.
    Returns (se_attention_map (B, C, H, W), contrastive_loss scalar).
    """
    B, C, H, W = x_nchw.shape
    HW = H * W
    R = w1.shape[0]
    out_dtype = jnp.dtype(x_nchw.dtype if out_dtype is None else out_dtype)

    # Native dtype across the pallas_call boundary; (B,C,H,W)->(B,C,HW) is a free
    # trailing-dim merge (no HBM pass). f32 cast happens in-register in the kernel.
    x = x_nchw.reshape(B, C, HW)

    # ---- generation-aware batch tiling with honest VMEM accounting ------------
    try:
        vmem_cap = int(pltpu.get_tpu_info().vmem_capacity_bytes)
    except Exception:                       # conservative fallback (v7x-sized)
        vmem_cap = 64 << 20
    budget = min(96 << 20, max(16 << 20, vmem_cap - (16 << 20)))

    in_bytes = jnp.dtype(x.dtype).itemsize
    out_bytes = out_dtype.itemsize
    Cp = pl.cdiv(C, 8) * 8                  # VMEM tiles pad to (8, 128)
    HWp = pl.cdiv(HW, 128) * 128
    per_ex_in = Cp * HWp * in_bytes
    per_ex_out = Cp * HWp * out_bytes
    per_ex_f32 = Cp * HWp * 4
    # 2x double-buffered input + 2x double-buffered output + ~5 live block-sized
    # f32 values inside the body (x, se, x2, one product, reduce temp).
    per_ex_total = 2 * per_ex_in + 2 * per_ex_out + 5 * per_ex_f32

    TB = max(1, min(B, budget // per_ex_total))
    if B >= 2 and pl.cdiv(B, TB) < 2:
        TB = pl.cdiv(B, 2)                  # keep >= 2 parallel steps (megacore / v7x)
    nblk = pl.cdiv(B, TB)                   # batch overhang handled by block masking
    # TODO(synk): if a single example exceeds the budget (TB=1 still too big) add an
    # H*W sub-tile pipeline (pooling pass, then scale+cosine pass); not needed here.

    footprint = TB * per_ex_total + 4 * C * max(R, 1) * 4
    vmem_limit = int(min(vmem_cap, max(footprint + (8 << 20), 32 << 20)))

    w1t = jnp.asarray(w1, jnp.float32).T                          # (C, R), tiny
    w2f = jnp.asarray(w2, jnp.float32)                            # (C, R), tiny

    kernel = functools.partial(_se_attention_kernel, inv_hw=float(1.0 / HW))

    se_flat, sims = pl.pallas_call(
        kernel,
        out_shape=(
            jax.ShapeDtypeStruct((B, C, HW), out_dtype),
            jax.ShapeDtypeStruct((B, 1, 1), jnp.float32),
        ),
        grid_spec=pltpu.PrefetchScalarGridSpec(
            num_scalar_prefetch=0,
            grid=(nblk,),
            in_specs=[
                pl.BlockSpec((TB, C, HW), lambda b: (b, 0, 0)),
                pl.BlockSpec((C, R), lambda b: (0, 0)),
                pl.BlockSpec((C, R), lambda b: (0, 0)),
            ],
            out_specs=[
                pl.BlockSpec((TB, C, HW), lambda b: (b, 0, 0)),
                pl.BlockSpec((TB, 1, 1), lambda b: (b, 0, 0)),
            ],
        ),
        compiler_params=pltpu.CompilerParams(
            dimension_semantics=("parallel",),
            vmem_limit_bytes=vmem_limit,
        ),
    )(x, w1t, w2f)

    se_map = se_flat.reshape(B, C, H, W)    # free trailing-dim split, no copy
    contrastive_loss = 1.0 - jnp.sum(sims) / jnp.float32(B * HW)
    return se_map, contrastive_loss


def _reference(x, w1, w2):
    # Pure-JAX f32 reference of the PyTorch forward (NCHW semantics).
    x = x.astype(jnp.float32)
    pooled = x.mean(axis=(2, 3))                                  # (B, C)
    h = jnp.maximum(pooled @ w1.T, 0.0)                           # (B, R)
    y = jax.nn.sigmoid(h @ w2.T)                                  # (B, C)
    se = x * y[:, :, None, None]
    eps = 1e-8
    num = jnp.sum(se * x, axis=1)                                 # (B, H, W)
    den = (jnp.maximum(jnp.linalg.norm(se, axis=1), eps)
           * jnp.maximum(jnp.linalg.norm(x, axis=1), eps))
    cos = num / den
    return se, 1.0 - cos.mean()


if __name__ == "__main__":
    key = jax.random.PRNGKey(0)
    configs = [
        # (B, C, reduction, H, W, dtype)
        (2, 64, 16, 16, 16, jnp.float32),    # HW = 256 (lane-aligned)
        (3, 32, 8, 7, 7, jnp.float32),       # HW = 49  (lane + batch remainder)
        (2, 64, 16, 16, 16, jnp.bfloat16),   # bf16 I/O path
    ]
    for (B, C, red, H, W, dt) in configs:
        R = C // red
        kx, k1, k2, key = jax.random.split(key, 4)
        x = jax.random.normal(kx, (B, C, H, W), dtype=jnp.float32).astype(dt)
        w1 = 0.1 * jax.random.normal(k1, (R, C), dtype=jnp.float32)   # fc[0].weight
        w2 = 0.1 * jax.random.normal(k2, (C, R), dtype=jnp.float32)   # fc[2].weight

        se_map, loss = se_attention(x, w1, w2)
        jax.block_until_ready((se_map, loss))

        se_ref, loss_ref = _reference(x.astype(jnp.float32), w1, w2)
        if dt == jnp.float32:
            se_tol = dict(rtol=1e-5, atol=1e-5)
        else:
            se_tol = dict(rtol=2e-2, atol=2e-2)   # final bf16 downcast of se
        np.testing.assert_allclose(np.asarray(se_map, dtype=np.float32),
                                   np.asarray(se_ref, dtype=np.float32), **se_tol)
        np.testing.assert_allclose(np.asarray(loss, dtype=np.float32),
                                   np.asarray(loss_ref, dtype=np.float32),
                                   rtol=1e-4, atol=1e-4)

    print("KERNEL_OK")
</pallas_src>

<mosaic_0001>
module attributes {stable_mosaic.version = 11 : i64} {
  func.func @_se_attention_kernel(%arg0: i32, %arg1: memref<1x64x256xf32, #tpu.memory_space<vmem>>, %arg2: memref<64x4xf32, #tpu.memory_space<vmem>>, %arg3: memref<64x4xf32, #tpu.memory_space<vmem>>, %arg4: memref<1x64x256xf32, #tpu.memory_space<vmem>>, %arg5: memref<1x1x1xf32, #tpu.memory_space<vmem>>) attributes {dimension_semantics = [#tpu.dimension_semantics<parallel>], iteration_bounds = array<i64: 2>, scalar_prefetch = 0 : i64, scratch_operands = 0 : i64, tpu.core_type = #tpu.core_type<tc>, window_params = [{transform_indices = @transform_0, window_bounds = array<i64: 1, 64, 256>}, {pipeline_mode = #tpu.pipeline_mode<synchronous>, transform_indices = @transform_1, window_bounds = array<i64: 64, 4>}, {pipeline_mode = #tpu.pipeline_mode<synchronous>, transform_indices = @transform_2, window_bounds = array<i64: 64, 4>}, {transform_indices = @transform_3, window_bounds = array<i64: 1, 64, 256>}, {transform_indices = @transform_4, window_bounds = array<i64: 1, 1, 1>}]} {
    %c0 = arith.constant 0 : index
    %c0_0 = arith.constant 0 : index
    %c0_1 = arith.constant 0 : index
    %0 = vector.load %arg1[%c0, %c0_0, %c0_1] : memref<1x64x256xf32, #tpu.memory_space<vmem>>, vector<1x64x256xf32>
    %cst = arith.constant dense<0.000000e+00> : vector<1x64xf32>
    %1 = vector.multi_reduction <add>, %0, %cst [2] : vector<1x64x256xf32> to vector<1x64xf32>
    %2 = vector.shape_cast %1 : vector<1x64xf32> to vector<1x64x1xf32>
    %cst_2 = arith.constant 3.906250e-03 : f32
    %3 = vector.broadcast %cst_2 : f32 to vector<1x64x1xf32>
    %4 = arith.mulf %2, %3 : vector<1x64x1xf32>
    %c0_3 = arith.constant 0 : index
    %c0_4 = arith.constant 0 : index
    %5 = vector.load %arg2[%c0_3, %c0_4] : memref<64x4xf32, #tpu.memory_space<vmem>>, vector<64x4xf32>
    %6 = vector.shape_cast %5 : vector<64x4xf32> to vector<1x64x4xf32>
    %7 = vector.broadcast %4 : vector<1x64x1xf32> to vector<1x64x4xf32>
    %8 = arith.mulf %6, %7 : vector<1x64x4xf32>
    %cst_5 = arith.constant dense<0.000000e+00> : vector<1x4xf32>
    %9 = vector.multi_reduction <add>, %8, %cst_5 [1] : vector<1x64x4xf32> to vector<1x4xf32>
    %10 = vector.shape_cast %9 : vector<1x4xf32> to vector<1x1x4xf32>
    %cst_6 = arith.constant 0.000000e+00 : f32
    %11 = vector.broadcast %cst_6 : f32 to vector<1x1x4xf32>
    %12 = arith.maximumf %10, %11 : vector<1x1x4xf32>
    %c0_7 = arith.constant 0 : index
    %c0_8 = arith.constant 0 : index
    %13 = vector.load %arg3[%c0_7, %c0_8] : memref<64x4xf32, #tpu.memory_space<vmem>>, vector<64x4xf32>
    %14 = vector.shape_cast %13 : vector<64x4xf32> to vector<1x64x4xf32>
    %15 = vector.broadcast %12 : vector<1x1x4xf32> to vector<1x64x4xf32>
    %16 = arith.mulf %14, %15 : vector<1x64x4xf32>
    %cst_9 = arith.constant dense<0.000000e+00> : vector<1x64xf32>
    %17 = vector.multi_reduction <add>, %16, %cst_9 [2] : vector<1x64x4xf32> to vector<1x64xf32>
    %18 = vector.shape_cast %17 : vector<1x64xf32> to vector<1x64x1xf32>
    %19 = arith.negf %18 : vector<1x64x1xf32>
    %20 = math.exp %19 : vector<1x64x1xf32>
    %cst_10 = arith.constant 1.000000e+00 : f32
    %21 = vector.broadcast %cst_10 : f32 to vector<1x64x1xf32>
    %22 = arith.addf %21, %20 : vector<1x64x1xf32>
    %23 = arith.divf %21, %22 : vector<1x64x1xf32>
    %24 = vector.broadcast %23 : vector<1x64x1xf32> to vector<1x64x256xf32>
    %25 = arith.mulf %0, %24 : vector<1x64x256xf32>
    %c0_11 = arith.constant 0 : index
    %c0_12 = arith.constant 0 : index
    %c0_13 = arith.constant 0 : index
    %26 = vector.load %arg4[%c0_11, %c0_12, %c0_13] : memref<1x64x256xf32, #tpu.memory_space<vmem>>, vector<1x64x256xf32>
    tpu.vector_store %arg4[%c0_11, %c0_12, %c0_13], %25 {strides = array<i32>} : memref<1x64x256xf32, #tpu.memory_space<vmem>>, vector<1x64x256xf32>,
    %27 = arith.mulf %0, %0 : vector<1x64x256xf32>
    %28 = arith.mulf %23, %23 : vector<1x64x1xf32>
    %cst_14 = arith.constant dense<0.000000e+00> : vector<1x256xf32>
    %29 = vector.multi_reduction <add>, %27, %cst_14 [1] : vector<1x64x256xf32> to vector<1x256xf32>
    %30 = vector.shape_cast %29 : vector<1x256xf32> to vector<1x1x256xf32>
    %31 = vector.broadcast %23 : vector<1x64x1xf32> to vector<1x64x256xf32>
    %32 = arith.mulf %27, %31 : vector<1x64x256xf32>
    %cst_15 = arith.constant dense<0.000000e+00> : vector<1x256xf32>
    %33 = vector.multi_reduction <add>, %32, %cst_15 [1] : vector<1x64x256xf32> to vector<1x256xf32>
    %34 = vector.shape_cast %33 : vector<1x256xf32> to vector<1x1x256xf32>
    %35 = vector.broadcast %28 : vector<1x64x1xf32> to vector<1x64x256xf32>
    %36 = arith.mulf %27, %35 : vector<1x64x256xf32>
    %cst_16 = arith.constant dense<0.000000e+00> : vector<1x256xf32>
    %37 = vector.multi_reduction <add>, %36, %cst_16 [1] : vector<1x64x256xf32> to vector<1x256xf32>
    %38 = vector.shape_cast %37 : vector<1x256xf32> to vector<1x1x256xf32>
    %cst_17 = arith.constant 1.000000e-16 : f32
    %39 = vector.broadcast %cst_17 : f32 to vector<1x1x256xf32>
    %40 = arith.maximumf %38, %39 : vector<1x1x256xf32>
    %41 = math.rsqrt %40 : vector<1x1x256xf32>
    %42 = arith.mulf %34, %41 : vector<1x1x256xf32>
    %cst_18 = arith.constant 1.000000e-16 : f32
    %43 = vector.broadcast %cst_18 : f32 to vector<1x1x256xf32>
    %44 = arith.maximumf %30, %43 : vector<1x1x256xf32>
    %45 = math.rsqrt %44 : vector<1x1x256xf32>
    %46 = arith.mulf %42, %45 : vector<1x1x256xf32>
    %cst_19 = arith.constant dense<0.000000e+00> : vector<1x1xf32>
    %47 = vector.multi_reduction <add>, %46, %cst_19 [2] : vector<1x1x256xf32> to vector<1x1xf32>
    %48 = vector.shape_cast %47 : vector<1x1xf32> to vector<1x1x1xf32>
    %c0_20 = arith.constant 0 : index
    %c0_21 = arith.constant 0 : index
    %c0_22 = arith.constant 0 : index
    %49 = vector.load %arg5[%c0_20, %c0_21, %c0_22] : memref<1x1x1xf32, #tpu.memory_space<vmem>>, vector<1x1x1xf32>
    tpu.vector_store %arg5[%c0_20, %c0_21, %c0_22], %48 {strides = array<i32>} : memref<1x1x1xf32, #tpu.memory_space<vmem>>, vector<1x1x1xf32>,
    return
  }
  func.func @transform_0(%arg0: i32) -> (i32, i32, i32) {
    %c0_i32 = arith.constant 0 : i32
    %c0_i32_0 = arith.constant 0 : i32
    %c0_i32_1 = arith.constant 0 : i32
    return %arg0, %c0_i32, %c0_i32_0 : i32, i32, i32
  }
  func.func @transform_1(%arg0: i32) -> (i32, i32) {
    %c0_i32 = arith.constant 0 : i32
    %c0_i32_0 = arith.constant 0 : i32
    %c0_i32_1 = arith.constant 0 : i32
    return %c0_i32, %c0_i32_0 : i32, i32
  }
  func.func @transform_2(%arg0: i32) -> (i32, i32) {
    %c0_i32 = arith.constant 0 : i32
    %c0_i32_0 = arith.constant 0 : i32
    %c0_i32_1 = arith.constant 0 : i32
    return %c0_i32, %c0_i32_0 : i32, i32
  }
  func.func @transform_3(%arg0: i32) -> (i32, i32, i32) {
    %c0_i32 = arith.constant 0 : i32
    %c0_i32_0 = arith.constant 0 : i32
    %c0_i32_1 = arith.constant 0 : i32
    return %arg0, %c0_i32, %c0_i32_0 : i32, i32, i32
  }
  func.func @transform_4(%arg0: i32) -> (i32, i32, i32) {
    %c0_i32 = arith.constant 0 : i32
    %c0_i32_0 = arith.constant 0 : i32
    %c0_i32_1 = arith.constant 0 : i32
    return %arg0, %c0_i32, %c0_i32_0 : i32, i32, i32
  }
}

</mosaic_0001>

<llo_original>
// kernel: tpu_custom_call.1
$region0: #{tpu_custom_call.1}
  #allocation0 [shape = 'u32[]', space=smem, size = 0x4, offset = 0x4, fixed_abs, tag = 'smem constant byte address 0x4 - core index']
  #allocation1 [shape = 'u32[144,128]{1,0:T(1,128)}', space=vmem, size = 0x12000, scoped, tag = 'internal scratch']
  %s0 = inlined_call_operand.hbm [shape: f32[2,64,256], index: 0, kind: input, shape index: {}]
  %s1 = inlined_call_operand.vmem [shape: f32[64,4], index: 1, kind: input, shape index: {}]
  %s2 = inlined_call_operand.vmem [shape: f32[64,4], index: 2, kind: input, shape index: {}]
  %s3 = inlined_call_operand.hbm [shape: f32[2,64,256], index: 3, kind: output, shape index: {0}]
  %s4 = inlined_call_operand.vmem [shape: f32[2,1,1], index: 4, kind: output, shape index: {1}]
  %5 = xla_tuple %s3, %s4
  %s6 = sld [smem:[#allocation0]]
  $region57: #{tpu_custom_call.1} parent=0
    _
  %s8 = ssub.s32 1, %s6
  %s9 = scalar_select 0, %s8, %s6
  $region1: #{tpu_custom_call.1} parent=0
    #allocation2 [shape = 'u8[131072]{0}', space=vmem, size = 0x20000, scoped, tag = 'input window, operand 0']
    #allocation3 [shape = 's32[2]{0}', space=sflag, size = 0x8, scoped, tag = 'scoped memory for tpu_custom_call.1']
    #allocation4 [shape = 's32[2]{0}', space=sflag, size = 0x8, scoped, tag = 'scoped memory for tpu_custom_call.1']
    #allocation5 [shape = 'u8[131072]{0}', space=vmem, size = 0x20000, scoped, tag = 'output window, operand 0']
    %10 = vsyncpa [#allocation3], 0
    %s11 = scalar_lea.sflag [#allocation3], 1
    %12 = vsyncpa %s11, 0
    %13 = vsyncpa [#allocation4], 0
    %s14 = scalar_lea.sflag [#allocation4], 1
    %15 = vsyncpa %s14, 0
    loop: start=0, step=1, limit=4
    $region2: #{tpu_custom_call.1} parent=1 // loop_pre_header
      _
    $region3: #{tpu_custom_call.1} parent=1 // loop_header
      %s17 = sphi 0, %s21
      %p18 = scmp.ge.s32.totalorder %s17, 4
      %s27 = sphi 0, %s29
      %s30 = sphi 0, %s27
      %s31 = sphi 0, %s30
      %s47 = sphi 0, %s31
      %s51 = sphi 0, %s51
      %s53 = sphi 0, %s51
      %s54 = sphi 0, %s53
      %s68 = sphi 0, %s54
      %s72 = sphi 0, %s72
      %s74 = sphi 0, %s72
      %s75 = sphi 0, %s74
      %s89 = sphi 0, %s75
      %s95 = sphi 0, %s97
      %s98 = sphi 0, %s95
      %s99 = sphi 0, %s98
      %s115 = sphi 0, %s99
      %s121 = sphi 0, %s123
      %s124 = sphi 0, %s121
      %s125 = sphi 0, %s124
      %s141 = sphi 0, %s125
    $region4: #{tpu_custom_call.1} parent=1 // loop_header_branch
      %20 = sbr.rel (%p18) target = $region8
    $region5: #{tpu_custom_call.1} parent=1 // loop_body
      %s22 = ssub.s32 %s17, 1
      %s23 = ssub.s32 %s17, 2
      %s24 = sadd.s32 %s17, 1
      %s25 = ssub.s32 %s17, %s24
      %p26 = scmp.eq.s32.totalorder %s25, 0
      %s28 = sadd.s32 %s27, 1
      %s29 = scalar_select %p26, %s27, %s28
      %p32 = pneg %p26
      %p33 = scmp.eq.s32.totalorder %s17, 1
      %p34 = por %p32, %p33
      %p35 = scmp.ne.s32.totalorder %s27, %s30
      %p36 = scmp.eq.s32.totalorder %s17, 0
      %p37 = por %p35, %p36
      %p38 = scmp.ne.s32.totalorder %s27, %s30
      %p39 = scmp.eq.s32.totalorder %s22, 1
      %p40 = por %p38, %p39
      %p41 = scmp.ne.s32.totalorder %s30, %s31
      %p42 = scmp.eq.s32.totalorder %s22, 0
      %p43 = por %p41, %p42
      %p44 = scmp.ne.s32.totalorder %s30, %s31
      %p45 = scmp.eq.s32.totalorder %s23, 1
      %p46 = por %p44, %p45
      %p48 = scmp.ne.s32.totalorder %s31, %s47
      %p49 = scmp.eq.s32.totalorder %s23, 0
      %p50 = por %p48, %p49
      %s52 = sadd.s32 %s51, 1
      %p55 = scmp.eq.s32.totalorder %s17, 1
      %p56 = scmp.ne.s32.totalorder %s51, %s53
      %p57 = scmp.eq.s32.totalorder %s17, 0
      %p58 = por %p56, %p57
      %p59 = scmp.ne.s32.totalorder %s51, %s53
      %p60 = scmp.eq.s32.totalorder %s22, 1
      %p61 = por %p59, %p60
      %p62 = scmp.ne.s32.totalorder %s53, %s54
      %p63 = scmp.eq.s32.totalorder %s22, 0
      %p64 = por %p62, %p63
      %p65 = scmp.ne.s32.totalorder %s53, %s54
      %p66 = scmp.eq.s32.totalorder %s23, 1
      %p67 = por %p65, %p66
      %p69 = scmp.ne.s32.totalorder %s54, %s68
      %p70 = scmp.eq.s32.totalorder %s23, 0
      %p71 = por %p69, %p70
      %s73 = sadd.s32 %s72, 1
      %p76 = scmp.eq.s32.totalorder %s17, 1
      %p77 = scmp.ne.s32.totalorder %s72, %s74
      %p78 = scmp.eq.s32.totalorder %s17, 0
      %p79 = por %p77, %p78
      %p80 = scmp.ne.s32.totalorder %s72, %s74
      %p81 = scmp.eq.s32.totalorder %s22, 1
      %p82 = por %p80, %p81
      %p83 = scmp.ne.s32.totalorder %s74, %s75
      %p84 = scmp.eq.s32.totalorder %s22, 0
      %p85 = por %p83, %p84
      %p86 = scmp.ne.s32.totalorder %s74, %s75
      %p87 = scmp.eq.s32.totalorder %s23, 1
      %p88 = por %p86, %p87
      %p90 = scmp.ne.s32.totalorder %s75, %s89
      %p91 = scmp.eq.s32.totalorder %s23, 0
      %p92 = por %p90, %p91
      %s93 = ssub.s32 %s17, %s24
      %p94 = scmp.eq.s32.totalorder %s93, 0
      %s96 = sadd.s32 %s95, 1
      %s97 = scalar_select %p94, %s95, %s96
      %p100 = pneg %p94
      %p101 = scmp.eq.s32.totalorder %s17, 1
      %p102 = por %p100, %p101
      %p103 = scmp.ne.s32.totalorder %s95, %s98
      %p104 = scmp.eq.s32.totalorder %s17, 0
      %p105 = por %p103, %p104
      %p106 = scmp.ne.s32.totalorder %s95, %s98
      %p107 = scmp.eq.s32.totalorder %s22, 1
      %p108 = por %p106, %p107
      %p109 = scmp.ne.s32.totalorder %s98, %s99
      %p110 = scmp.eq.s32.totalorder %s22, 0
      %p111 = por %p109, %p110
      %p112 = scmp.ne.s32.totalorder %s98, %s99
      %p113 = scmp.eq.s32.totalorder %s23, 1
      %p114 = por %p112, %p113
      %p116 = scmp.ne.s32.totalorder %s99, %s115
      %p117 = scmp.eq.s32.totalorder %s23, 0
      %p118 = por %p116, %p117
      %s119 = ssub.s32 %s17, %s24
      %p120 = scmp.eq.s32.totalorder %s119, 0
      %s122 = sadd.s32 %s121, 1
      %s123 = scalar_select %p120, %s121, %s122
      %p126 = pneg %p120
      %p127 = scmp.eq.s32.totalorder %s17, 1
      %p128 = por %p126, %p127
      %p129 = scmp.ne.s32.totalorder %s121, %s124
      %p130 = scmp.eq.s32.totalorder %s17, 0
      %p131 = por %p129, %p130
      %p132 = scmp.ne.s32.totalorder %s121, %s124
      %p133 = scmp.eq.s32.totalorder %s22, 1
      %p134 = por %p132, %p133
      %p135 = scmp.ne.s32.totalorder %s124, %s125
      %p136 = scmp.eq.s32.totalorder %s22, 0
      %p137 = por %p135, %p136
      %p138 = scmp.ne.s32.totalorder %s124, %s125
      %p139 = scmp.eq.s32.totalorder %s23, 1
      %p140 = por %p138, %p139
      %p142 = scmp.ne.s32.totalorder %s125, %s141
      %p143 = scmp.eq.s32.totalorder %s23, 0
      %p144 = por %p142, %p143
      %p145 = scmp.le.s32.totalorder 1, %s17
      %p146 = scmp.lt.s32.totalorder %s17, 3
      %p147 = pnand %p145, %p146
      %p148 = pneg %p147
      // Predicated region
      $region9: #{tpu_custom_call.1} parent=5 // pred_check
        _
      $region10: #{tpu_custom_call.1} parent=5 // pred_check_branch
        %150 = sbr.rel (%p147) target = $region12
      $region11: #{tpu_custom_call.1} parent=5 // pred_region
        %s151 = ssub.s32 %s17, 1
        // Predicated region
        $region13: #{tpu_custom_call.1} parent=11 // pred_check
          %p152 = pneg %p64
        $region14: #{tpu_custom_call.1} parent=11 // pred_check_branch
          %154 = sbr.rel (%p152) target = $region16
        $region15: #{tpu_custom_call.1} parent=11 // pred_region
          _
        $region16: #{tpu_custom_call.1} parent=11 // pred_fallthru
          _
        // Predicated region
        $region17: #{tpu_custom_call.1} parent=11 // pred_check
          %p155 = pneg %p85
        $region18: #{tpu_custom_call.1} parent=11 // pred_check_branch
          %157 = sbr.rel (%p155) target = $region20
        $region19: #{tpu_custom_call.1} parent=11 // pred_region
          _
        $region20: #{tpu_custom_call.1} parent=11 // pred_fallthru
          _
      $region12: #{tpu_custom_call.1} parent=5 // pred_fallthru
        _
      %p158 = scmp.lt.s32.totalorder %s17, 2
      // Predicated region
      $region21: #{tpu_custom_call.1} parent=5 // pred_check
        %p159 = pneg %p158
      $region22: #{tpu_custom_call.1} parent=5 // pred_check_branch
        %161 = sbr.rel (%p159) target = $region24
      $region23: #{tpu_custom_call.1} parent=5 // pred_region
        // Predicated region
        $region25: #{tpu_custom_call.1} parent=23 // pred_check
          %p162 = pneg %p37
        $region26: #{tpu_custom_call.1} parent=23 // pred_check_branch
          %164 = sbr.rel (%p162) target = $region28
        $region27: #{tpu_custom_call.1} parent=23 // pred_region
          %s165 = sand.u32 %s27, 1
          %s166 = scalar_lea.sflag [#allocation3], %s165
          %s167 = sand.u32 %s27, 1
          %s168 = smul.addr %s167, 128
          %s169 = scalar_lea.vmem [#allocation2], %s168
          %s171 = ssub.s32 2048, 2048
          %172 = vsyncadd %s166, %s171
          %s173 = smul.addr %s17, 16
          %s174 = smul.addr %s173, 128
          %s175 = scalar_lea.hbm %s0, %s174
          %s176 = sshll.u32 %s169, 4
          %s177 = int_to_ptr.vmem [resolvable:$true] %s176
          %182 = dma.hbm_to_vmem [thread:$0]  %s175, 2048, %s177, %s166, 256, 256, 16
        $region28: #{tpu_custom_call.1} parent=23 // pred_fallthru
          _
      $region24: #{tpu_custom_call.1} parent=5 // pred_fallthru
        _
      %p183 = scmp.le.s32.totalorder 1, %s17
      %p184 = scmp.lt.s32.totalorder %s17, 3
      %p185 = pnand %p183, %p184
      %p186 = pneg %p185
      // Predicated region
      $region29: #{tpu_custom_call.1} parent=5 // pred_check
        _
      $region30: #{tpu_custom_call.1} parent=5 // pred_check_branch
        %188 = sbr.rel (%p185) target = $region32
      $region31: #{tpu_custom_call.1} parent=5 // pred_region
        %s189 = ssub.s32 %s17, 1
        %s190 = sand.u32 %s30, 1
        %s191 = scalar_lea.sflag [#allocation3], %s190
        %s192 = sand.u32 %s30, 1
        %s193 = smul.addr %s192, 128
        %s194 = scalar_lea.vmem [#allocation2], %s193
        // Predicated region
        $region33: #{tpu_custom_call.1} parent=31 // pred_check
          %p195 = pneg %p43
        $region34: #{tpu_custom_call.1} parent=31 // pred_check_branch
          %197 = sbr.rel (%p195) target = $region36
        $region35: #{tpu_custom_call.1} parent=31 // pred_region
          %198 = dma.done %s191, 2048
        $region36: #{tpu_custom_call.1} parent=31 // pred_fallthru
          _
        %s199 = sand.u32 %s30, 1
        %s200 = scalar_lea.sflag [#allocation3], %s199
        %s201 = sand.u32 %s30, 1
        %s202 = smul.addr %s201, 128
        %s203 = scalar_lea.vmem [#allocation2], %s202
        %p204 = pneg %p43
        %p205 = pneg %p40
        %p206 = pneg %p64
        %p207 = pneg %p61
        %p208 = pneg %p85
        %p209 = pneg %p82
        %p210 = pneg %p111
        %p211 = pneg %p108
        %s212 = sand.u32 %s98, 1
        %s213 = scalar_lea.sflag [#allocation4], %s212
        %s214 = sand.u32 %s98, 1
        %s215 = smul.addr %s214, 128
        %s216 = scalar_lea.vmem [#allocation5], %s215
        %p217 = pneg %p137
        %p218 = pneg %p134
        %p219 = scmp.lt.s32.totalorder %s22, 1
        %s220 = scalar_select %p219, %s22, 1
        %s221 = scalar_lea.vmem %s4, %s220
        %p222 = scmp.lt.s32.totalorder %s22, 1
        %s223 = scalar_select %p222, %s22, 1
        %s224 = scalar_lea.vmem %s4, %s223
        %v225 = vld [vmem:[%s194] sm:$0xff]
        %v226 = vld [vmem:[%s194 + $0x8] sm:$0xff]
        %v227 = vld [vmem:[%s194 + $0x10] sm:$0xff]
        %v228 = vld [vmem:[%s194 + $0x18] sm:$0xff]
        %v229 = vld [vmem:[%s194 + $0x20] sm:$0xff]
        %v230 = vld [vmem:[%s194 + $0x28] sm:$0xff]
        %v231 = vld [vmem:[%s194 + $0x30] sm:$0xff]
        %v232 = vld [vmem:[%s194 + $0x38] sm:$0xff]
        %v233 = vld [vmem:[%s194 + $0x40] sm:$0xff]
        %v234 = vld [vmem:[%s194 + $0x48] sm:$0xff]
        %v235 = vld [vmem:[%s194 + $0x50] sm:$0xff]
        %v236 = vld [vmem:[%s194 + $0x58] sm:$0xff]
        %v237 = vld [vmem:[%s194 + $0x60] sm:$0xff]
        %v238 = vld [vmem:[%s194 + $0x68] sm:$0xff]
        %v239 = vld [vmem:[%s194 + $0x70] sm:$0xff]
        %v240 = vld [vmem:[%s194 + $0x78] sm:$0xff]
        %v241 = vadd.f32 %v225, %v226
        %242 = vadd.xlane.f32.xlu0 %v241
        %v243 = vpop.xlane.xlu0 %242
        %v244 = vadd.f32 %v227, %v228
        %245 = vadd.xlane.f32.xlu0 %v244
        %v246 = vpop.xlane.xlu0 %245
        %v247 = vadd.f32 %v229, %v230
        %248 = vadd.xlane.f32.xlu0 %v247
        %v249 = vpop.xlane.xlu0 %248
        %v250 = vadd.f32 %v231, %v232
        %251 = vadd.xlane.f32.xlu0 %v250
        %v252 = vpop.xlane.xlu0 %251
        %v253 = vadd.f32 %v233, %v234
        %254 = vadd.xlane.f32.xlu0 %v253
        %v255 = vpop.xlane.xlu0 %254
        %v256 = vadd.f32 %v235, %v236
        %257 = vadd.xlane.f32.xlu0 %v256
        %v258 = vpop.xlane.xlu0 %257
        %v259 = vadd.f32 %v237, %v238
        %260 = vadd.xlane.f32.xlu0 %v259
        %v261 = vpop.xlane.xlu0 %260
        %v262 = vadd.f32 %v239, %v240
        %263 = vadd.xlane.f32.xlu0 %v262
        %v264 = vpop.xlane.xlu0 %263
        %v265 = vmul.f32 %v243, 0.00390625
        %v266 = vmul.f32 %v246, 0.00390625
        %v267 = vmul.f32 %v249, 0.00390625
        %v268 = vmul.f32 %v252, 0.00390625
        %v269 = vmul.f32 %v255, 0.00390625
        %v270 = vmul.f32 %v258, 0.00390625
        %v271 = vmul.f32 %v261, 0.00390625
        %v272 = vmul.f32 %v264, 0.00390625
        %v273 = vld [vmem:[%s1] sm:$0xff]
        %v274 = vld [vmem:[%s1 + $0x8] sm:$0xff]
        %v275 = vld [vmem:[%s1 + $0x10] sm:$0xff]
        %v276 = vld [vmem:[%s1 + $0x18] sm:$0xff]
        %v277 = vld [vmem:[%s1 + $0x20] sm:$0xff]
        %v278 = vld [vmem:[%s1 + $0x28] sm:$0xff]
        %v279 = vld [vmem:[%s1 + $0x30] sm:$0xff]
        %v280 = vld [vmem:[%s1 + $0x38] sm:$0xff]
        %v281 = vmul.f32 %v273, %v265
        %v282 = vmul.f32 %v274, %v266
        %v283 = vmul.f32 %v275, %v267
        %v284 = vmul.f32 %v276, %v268
        %v285 = vmul.f32 %v277, %v269
        %v286 = vmul.f32 %v278, %v270
        %v287 = vmul.f32 %v279, %v271
        %v288 = vmul.f32 %v280, %v272
        %vm289 = vcmask 31744
        %v290 = vsel %vm289, %v281, 0.0
        %v291 = vsel %vm289, %v282, 0.0
        %v292 = vadd.f32 %v290, %v291
        %v293 = vsel %vm289, %v283, 0.0
        %v294 = vadd.f32 %v292, %v293
        %v295 = vsel %vm289, %v284, 0.0
        %v296 = vadd.f32 %v294, %v295
        %v297 = vsel %vm289, %v285, 0.0
        %v298 = vadd.f32 %v296, %v297
        %v299 = vsel %vm289, %v286, 0.0
        %v300 = vadd.f32 %v298, %v299
        %v301 = vsel %vm289, %v287, 0.0
        %v302 = vadd.f32 %v300, %v301
        %v303 = vsel %vm289, %v288, 0.0
        %v304 = vadd.f32 %v302, %v303
        %v305 = vrot.slane %v304, 4
        %v306 = vadd.f32 %v304, %v305
        %v307 = vrot.slane %v306, 2
        %v308 = vadd.f32 %v306, %v307
        %v309 = vrot.slane %v308, 1
        %v310 = vadd.f32 %v308, %v309
        %v311 = vmax.f32 %v310, 0.0
        %v312 = vld [vmem:[%s2] sm:$0xff]
        %v313 = vld [vmem:[%s2 + $0x8] sm:$0xff]
        %v314 = vld [vmem:[%s2 + $0x10] sm:$0xff]
        %v315 = vld [vmem:[%s2 + $0x18] sm:$0xff]
        %v316 = vld [vmem:[%s2 + $0x20] sm:$0xff]
        %v317 = vld [vmem:[%s2 + $0x28] sm:$0xff]
        %v318 = vld [vmem:[%s2 + $0x30] sm:$0xff]
        %v319 = vld [vmem:[%s2 + $0x38] sm:$0xff]
        %v320 = vmul.f32 %v312, %v311
        %v321 = vmul.f32 %v313, %v311
        %v322 = vmul.f32 %v314, %v311
        %v323 = vmul.f32 %v315, %v311
        %v324 = vmul.f32 %v316, %v311
        %v325 = vmul.f32 %v317, %v311
        %v326 = vmul.f32 %v318, %v311
        %v327 = vmul.f32 %v319, %v311
        %v328 = vsel %vm289, %v320, 0.0
        %329 = vadd.xlane.f32.xlu0 %v328
        %v330 = vpop.xlane.xlu0 %329
        %v331 = vsel %vm289, %v321, 0.0
        %332 = vadd.xlane.f32.xlu0 %v331
        %v333 = vpop.xlane.xlu0 %332
        %v334 = vsel %vm289, %v322, 0.0
        %335 = vadd.xlane.f32.xlu0 %v334
        %v336 = vpop.xlane.xlu0 %335
        %v337 = vsel %vm289, %v323, 0.0
        %338 = vadd.xlane.f32.xlu0 %v337
        %v339 = vpop.xlane.xlu0 %338
        %v340 = vsel %vm289, %v324, 0.0
        %341 = vadd.xlane.f32.xlu0 %v340
        %v342 = vpop.xlane.xlu0 %341
        %v343 = vsel %vm289, %v325, 0.0
        %344 = vadd.xlane.f32.xlu0 %v343
        %v345 = vpop.xlane.xlu0 %344
        %v346 = vsel %vm289, %v326, 0.0
        %347 = vadd.xlane.f32.xlu0 %v346
        %v348 = vpop.xlane.xlu0 %347
        %v349 = vsel %vm289, %v327, 0.0
        %350 = vadd.xlane.f32.xlu0 %v349
        %v351 = vpop.xlane.xlu0 %350
        %v352 = vxor.u32 %v330, 2147483648
        %v353 = vxor.u32 %v333, 2147483648
        %v354 = vxor.u32 %v336, 2147483648
        %v355 = vxor.u32 %v339, 2147483648
        %v356 = vxor.u32 %v342, 2147483648
        %v357 = vxor.u32 %v345, 2147483648
        %v358 = vxor.u32 %v348, 2147483648
        %v359 = vxor.u32 %v351, 2147483648
        %v360 = vmul.f32 %v352, 1.442695
        %v361 = vpow.pop %v360
        %v362 = vmul.f32 %v353, 1.442695
        %v363 = vpow.pop %v362
        %v364 = vmul.f32 %v354, 1.442695
        %v365 = vpow.pop %v364
        %v366 = vmul.f32 %v355, 1.442695
        %v367 = vpow.pop %v366
        %v368 = vmul.f32 %v356, 1.442695
        %v369 = vpow.pop %v368
        %v370 = vmul.f32 %v357, 1.442695
        %v371 = vpow.pop %v370
        %v372 = vmul.f32 %v358, 1.442695
        %v373 = vpow.pop %v372
        %v374 = vmul.f32 %v359, 1.442695
        %v375 = vpow.pop %v374
        %v376 = vadd.f32 %v361, 1.0
        %v377 = vadd.f32 %v363, 1.0
        %v378 = vadd.f32 %v365, 1.0
        %v379 = vadd.f32 %v367, 1.0
        %v380 = vadd.f32 %v369, 1.0
        %v381 = vadd.f32 %v371, 1.0
        %v382 = vadd.f32 %v373, 1.0
        %v383 = vadd.f32 %v375, 1.0
        %v384 = vrcp.pop %v376
        %v385 = vmul.f32 1.0, %v384
        %v386 = vrcp.pop %v377
        %v387 = vmul.f32 1.0, %v386
        %v388 = vrcp.pop %v378
        %v389 = vmul.f32 1.0, %v388
        %v390 = vrcp.pop %v379
        %v391 = vmul.f32 1.0, %v390
        %v392 = vrcp.pop %v380
        %v393 = vmul.f32 1.0, %v392
        %v394 = vrcp.pop %v381
        %v395 = vmul.f32 1.0, %v394
        %v396 = vrcp.pop %v382
        %v397 = vmul.f32 1.0, %v396
        %v398 = vrcp.pop %v383
        %v399 = vmul.f32 1.0, %v398
        %v400 = vmul.f32 %v225, %v385
        %v401 = vmul.f32 %v226, %v385
        %v402 = vmul.f32 %v227, %v387
        %v403 = vmul.f32 %v228, %v387
        %v404 = vmul.f32 %v229, %v389
        %v405 = vmul.f32 %v230, %v389
        %v406 = vmul.f32 %v231, %v391
        %v407 = vmul.f32 %v232, %v391
        %v408 = vmul.f32 %v233, %v393
        %v409 = vmul.f32 %v234, %v393
        %v410 = vmul.f32 %v235, %v395
        %v411 = vmul.f32 %v236, %v395
        %v412 = vmul.f32 %v237, %v397
        %v413 = vmul.f32 %v238, %v397
        %v414 = vmul.f32 %v239, %v399
        %v415 = vmul.f32 %v240, %v399
        %416 = vst [vmem:[%s216] sm:$0xff] %v400
        %417 = vst [vmem:[%s216 + $0x8] sm:$0xff] %v401
        %418 = vst [vmem:[%s216 + $0x10] sm:$0xff] %v402
        %419 = vst [vmem:[%s216 + $0x18] sm:$0xff] %v403
        %420 = vst [vmem:[%s216 + $0x20] sm:$0xff] %v404
        %421 = vst [vmem:[%s216 + $0x28] sm:$0xff] %v405
        %422 = vst [vmem:[%s216 + $0x30] sm:$0xff] %v406
        %423 = vst [vmem:[%s216 + $0x38] sm:$0xff] %v407
        %424 = vst [vmem:[%s216 + $0x40] sm:$0xff] %v408
        %425 = vst [vmem:[%s216 + $0x48] sm:$0xff] %v409
        %426 = vst [vmem:[%s216 + $0x50] sm:$0xff] %v410
        %427 = vst [vmem:[%s216 + $0x58] sm:$0xff] %v411
        %428 = vst [vmem:[%s216 + $0x60] sm:$0xff] %v412
        %429 = vst [vmem:[%s216 + $0x68] sm:$0xff] %v413
        %430 = vst [vmem:[%s216 + $0x70] sm:$0xff] %v414
        %431 = vst [vmem:[%s216 + $0x78] sm:$0xff] %v415
        %v432 = vmul.f32 %v225, %v225
        %v433 = vmul.f32 %v226, %v226
        %v434 = vmul.f32 %v227, %v227
        %v435 = vmul.f32 %v228, %v228
        %v436 = vmul.f32 %v229, %v229
        %v437 = vmul.f32 %v230, %v230
        %v438 = vmul.f32 %v231, %v231
        %v439 = vmul.f32 %v232, %v232
        %v440 = vmul.f32 %v233, %v233
        %v441 = vmul.f32 %v234, %v234
        %v442 = vmul.f32 %v235, %v235
        %v443 = vmul.f32 %v236, %v236
        %v444 = vmul.f32 %v237, %v237
        %v445 = vmul.f32 %v238, %v238
        %v446 = vmul.f32 %v239, %v239
        %v447 = vmul.f32 %v240, %v240
        %v448 = vmul.f32 %v385, %v385
        %v449 = vmul.f32 %v387, %v387
        %v450 = vmul.f32 %v389, %v389
        %v451 = vmul.f32 %v391, %v391
        %v452 = vmul.f32 %v393, %v393
        %v453 = vmul.f32 %v395, %v395
        %v454 = vmul.f32 %v397, %v397
        %v455 = vmul.f32 %v399, %v399
        %v456 = vadd.f32 %v432, %v434
        %v457 = vadd.f32 %v456, %v436
        %v458 = vadd.f32 %v457, %v438
        %v459 = vadd.f32 %v458, %v440
        %v460 = vadd.f32 %v459, %v442
        %v461 = vadd.f32 %v460, %v444
        %v462 = vadd.f32 %v461, %v446
        %v463 = vrot.slane %v462, 4
        %v464 = vadd.f32 %v462, %v463
        %v465 = vrot.slane %v464, 2
        %v466 = vadd.f32 %v464, %v465
        %v467 = vrot.slane %v466, 1
        %v468 = vadd.f32 %v466, %v467
        %v469 = vadd.f32 %v433, %v435
        %v470 = vadd.f32 %v469, %v437
        %v471 = vadd.f32 %v470, %v439
        %v472 = vadd.f32 %v471, %v441
        %v473 = vadd.f32 %v472, %v443
        %v474 = vadd.f32 %v473, %v445
        %v475 = vadd.f32 %v474, %v447
        %v476 = vrot.slane %v475, 4
        %v477 = vadd.f32 %v475, %v476
        %v478 = vrot.slane %v477, 2
        %v479 = vadd.f32 %v477, %v478
        %v480 = vrot.slane %v479, 1
        %v481 = vadd.f32 %v479, %v480
        %v482 = vmul.f32 %v432, %v385
        %v483 = vmul.f32 %v433, %v385
        %v484 = vmul.f32 %v434, %v387
        %v485 = vmul.f32 %v435, %v387
        %v486 = vmul.f32 %v436, %v389
        %v487 = vmul.f32 %v437, %v389
        %v488 = vmul.f32 %v438, %v391
        %v489 = vmul.f32 %v439, %v391
        %v490 = vmul.f32 %v440, %v393
        %v491 = vmul.f32 %v441, %v393
        %v492 = vmul.f32 %v442, %v395
        %v493 = vmul.f32 %v443, %v395
        %v494 = vmul.f32 %v444, %v397
        %v495 = vmul.f32 %v445, %v397
        %v496 = vmul.f32 %v446, %v399
        %v497 = vmul.f32 %v447, %v399
        %v498 = vadd.f32 %v482, %v484
        %v499 = vadd.f32 %v498, %v486
        %v500 = vadd.f32 %v499, %v488
        %v501 = vadd.f32 %v500, %v490
        %v502 = vadd.f32 %v501, %v492
        %v503 = vadd.f32 %v502, %v494
        %v504 = vadd.f32 %v503, %v496
        %v505 = vrot.slane %v504, 4
        %v506 = vadd.f32 %v504, %v505
        %v507 = vrot.slane %v506, 2
        %v508 = vadd.f32 %v506, %v507
        %v509 = vrot.slane %v508, 1
        %v510 = vadd.f32 %v508, %v509
        %v511 = vadd.f32 %v483, %v485
        %v512 = vadd.f32 %v511, %v487
        %v513 = vadd.f32 %v512, %v489
        %v514 = vadd.f32 %v513, %v491
        %v515 = vadd.f32 %v514, %v493
        %v516 = vadd.f32 %v515, %v495
        %v517 = vadd.f32 %v516, %v497
        %v518 = vrot.slane %v517, 4
        %v519 = vadd.f32 %v517, %v518
        %v520 = vrot.slane %v519, 2
        %v521 = vadd.f32 %v519, %v520
        %v522 = vrot.slane %v521, 1
        %v523 = vadd.f32 %v521, %v522
        %v524 = vmul.f32 %v432, %v448
        %v525 = vmul.f32 %v433, %v448
        %v526 = vmul.f32 %v434, %v449
        %v527 = vmul.f32 %v435, %v449
        %v528 = vmul.f32 %v436, %v450
        %v529 = vmul.f32 %v437, %v450
        %v530 = vmul.f32 %v438, %v451
        %v531 = vmul.f32 %v439, %v451
        %v532 = vmul.f32 %v440, %v452
        %v533 = vmul.f32 %v441, %v452
        %v534 = vmul.f32 %v442, %v453
        %v535 = vmul.f32 %v443, %v453
        %v536 = vmul.f32 %v444, %v454
        %v537 = vmul.f32 %v445, %v454
        %v538 = vmul.f32 %v446, %v455
        %v539 = vmul.f32 %v447, %v455
        %v540 = vadd.f32 %v524, %v526
        %v541 = vadd.f32 %v540, %v528
        %v542 = vadd.f32 %v541, %v530
        %v543 = vadd.f32 %v542, %v532
        %v544 = vadd.f32 %v543, %v534
        %v545 = vadd.f32 %v544, %v536
        %v546 = vadd.f32 %v545, %v538
        %v547 = vrot.slane %v546, 4
        %v548 = vadd.f32 %v546, %v547
        %v549 = vrot.slane %v548, 2
        %v550 = vadd.f32 %v548, %v549
        %v551 = vrot.slane %v550, 1
        %v552 = vadd.f32 %v550, %v551
        %v553 = vadd.f32 %v525, %v527
        %v554 = vadd.f32 %v553, %v529
        %v555 = vadd.f32 %v554, %v531
        %v556 = vadd.f32 %v555, %v533
        %v557 = vadd.f32 %v556, %v535
        %v558 = vadd.f32 %v557, %v537
        %v559 = vadd.f32 %v558, %v539
        %v560 = vrot.slane %v559, 4
        %v561 = vadd.f32 %v559, %v560
        %v562 = vrot.slane %v561, 2
        %v563 = vadd.f32 %v561, %v562
        %v564 = vrot.slane %v563, 1
        %v565 = vadd.f32 %v563, %v564
        %v566 = vmax.f32 %v552, 1e-16
        %v567 = vmax.f32 %v565, 1e-16
        %v568 = vrsqrt.pop %v566
        %v569 = vrsqrt.pop %v567
        %v570 = vmul.f32 %v510, %v568
        %v571 = vmul.f32 %v523, %v569
        %v572 = vmax.f32 %v468, 1e-16
        %v573 = vmax.f32 %v481, 1e-16
        %v574 = vrsqrt.pop %v572
        %v575 = vrsqrt.pop %v573
        %v576 = vmul.f32 %v570, %v574
        %v577 = vmul.f32 %v571, %v575
        %v578 = vadd.f32 %v576, %v577
        %579 = vadd.xlane.f32.xlu0 %v578
        %v580 = vpop.xlane.xlu0 %579
        %vm581 = vcmask 0
        %582 = vst.msk [vmem:[%s224] sm:$0x1] %vm581, %v580
        %s583 = sand.u32 %s98, 1
        %s584 = scalar_lea.sflag [#allocation4], %s583
        %s585 = sand.u32 %s98, 1
        %s586 = smul.addr %s585, 128
        %s587 = scalar_lea.vmem [#allocation5], %s586
        %p588 = scmp.lt.s32.totalorder %s22, 1
        %s589 = scalar_select %p588, %s22, 1
        %s590 = scalar_lea.vmem %s4, %s589
        // Predicated region
        $region37: #{tpu_custom_call.1} parent=31 // pred_check
          %p591 = pneg %p108
        $region38: #{tpu_custom_call.1} parent=31 // pred_check_branch
          %593 = sbr.rel (%p591) target = $region40
        $region39: #{tpu_custom_call.1} parent=31 // pred_region
          %s595 = ssub.s32 2048, 2048
          %596 = vsyncadd %s584, %s595
          %s597 = smul.addr %s22, 16
          %s598 = smul.addr %s597, 128
          %s599 = scalar_lea.hbm %s3, %s598
          %s600 = sshll.u32 %s587, 4
          %s601 = int_to_ptr.vmem [resolvable:$true] %s600
          %606 = dma.vmem_to_hbm [thread:$0]  %s601, 2048, %s599, %s584, 256, 256, 16
        $region40: #{tpu_custom_call.1} parent=31 // pred_fallthru
          _
        // Predicated region
        $region41: #{tpu_custom_call.1} parent=31 // pred_check
          %p607 = pneg %p134
        $region42: #{tpu_custom_call.1} parent=31 // pred_check_branch
          %609 = sbr.rel (%p607) target = $region44
        $region43: #{tpu_custom_call.1} parent=31 // pred_region
          _
        $region44: #{tpu_custom_call.1} parent=31 // pred_fallthru
          _
      $region32: #{tpu_custom_call.1} parent=5 // pred_fallthru
        _
      %p610 = scmp.le.s32.totalorder 2, %s17
      // Predicated region
      $region45: #{tpu_custom_call.1} parent=5 // pred_check
        %p611 = pneg %p610
      $region46: #{tpu_custom_call.1} parent=5 // pred_check_branch
        %613 = sbr.rel (%p611) target = $region48
      $region47: #{tpu_custom_call.1} parent=5 // pred_region
        %s614 = ssub.s32 %s17, 2
        // Predicated region
        $region49: #{tpu_custom_call.1} parent=47 // pred_check
          %p615 = pneg %p114
        $region50: #{tpu_custom_call.1} parent=47 // pred_check_branch
          %617 = sbr.rel (%p615) target = $region52
        $region51: #{tpu_custom_call.1} parent=47 // pred_region
          %s618 = sand.u32 %s99, 1
          %s619 = scalar_lea.sflag [#allocation4], %s618
          %s620 = sand.u32 %s99, 1
          %s621 = smul.addr %s620, 128
          %s622 = scalar_lea.vmem [#allocation5], %s621
          %623 = dma.done %s619, 2048
        $region52: #{tpu_custom_call.1} parent=47 // pred_fallthru
          _
        // Predicated region
        $region53: #{tpu_custom_call.1} parent=47 // pred_check
          %p624 = pneg %p140
        $region54: #{tpu_custom_call.1} parent=47 // pred_check_branch
          %626 = sbr.rel (%p624) target = $region56
        $region55: #{tpu_custom_call.1} parent=47 // pred_region
          %p627 = scmp.lt.s32.totalorder %s23, 1
          %s628 = scalar_select %p627, %s23, 1
          %s629 = scalar_lea.vmem %s4, %s628
        $region56: #{tpu_custom_call.1} parent=47 // pred_fallthru
          _
      $region48: #{tpu_custom_call.1} parent=5 // pred_fallthru
        _
    $region6: #{tpu_custom_call.1} parent=1 // loop_footer
      %s21 = sadd.s32 1, %s17
    $region7: #{tpu_custom_call.1} parent=1 // loop_footer_branch
      %16 = sbr.rel target = $region3
    $region8: #{tpu_custom_call.1} parent=1 // loop_exit
      _
    %630 = vsyncpa [#allocation3], 1
    %s631 = scalar_lea.sflag [#allocation3], 1
    %632 = vsyncpa %s631, 1
    %633 = vsyncpa [#allocation4], 1
    %s634 = scalar_lea.sflag [#allocation4], 1
    %635 = vsyncpa %s634, 1

</llo_original>
